<compile_context>
chip_gen: v7x
topology: tpu7x:2x2x1
jax: 0.10.0
libtpu: 0.0.40
codegen_flags: <defaults>
</compile_context>

<pallas_src>
import functools
import math

import numpy as np

import jax
import jax.numpy as jnp
from jax.experimental import pallas as pl
from jax.experimental.pallas import tpu as pltpu


# ----------------------------------------------------------------------------
# helpers
# ----------------------------------------------------------------------------
def _pad_rows(x, mult):
    pad = (-x.shape[0]) % mult
    if pad == 0:
        return x
    return jnp.concatenate(
        [x, jnp.zeros((pad,) + x.shape[1:], x.dtype)], axis=0)


# ----------------------------------------------------------------------------
# Kernel 1: fused node projection   proj = h @ [Wq | Wk_r | Wv_r | ...] + b
# ----------------------------------------------------------------------------
def _proj_kernel(x_ref, w_ref, b_ref, o_ref):
    # x: (TM, Din) f32, w: (Din, C) bf16, b: (1, C) f32
    acc = jnp.dot(x_ref[...].astype(jnp.bfloat16), w_ref[...],
                  preferred_element_type=jnp.float32)
    o_ref[...] = acc + b_ref[...]


def fused_projection(x, w_bf16, b, *, tm=8):
    n, din = x.shape
    c = w_bf16.shape[1]
    assert n % tm == 0
    return pl.pallas_call(
        _proj_kernel,
        out_shape=jax.ShapeDtypeStruct((n, c), jnp.float32),
        grid_spec=pltpu.PrefetchScalarGridSpec(
            num_scalar_prefetch=0,
            grid=(n // tm,),
            in_specs=[pl.BlockSpec((tm, din), lambda i: (i, 0)),
                      pl.BlockSpec((din, c), lambda i: (0, 0)),
                      pl.BlockSpec((1, c), lambda i: (0, 0))],
            out_specs=pl.BlockSpec((tm, c), lambda i: (i, 0))),
        compiler_params=pltpu.CompilerParams(
            dimension_semantics=("parallel",),
            vmem_limit_bytes=64 * 1024 * 1024),
    )(x, w_bf16, b)


# ----------------------------------------------------------------------------
# Kernel 2: per-relation edge attention + aggregation
#   grid over destination-node tiles; neighbour src indices scalar-prefetched.
# ----------------------------------------------------------------------------
def _edge_attn_kernel(nbr_ref,                       # SMEM (Npad*max_deg,) int32
                      k_ref, v_ref, q_ref, pri_ref, mask_ref,
                      hsum_ref, expand_ref,
                      t_ref,
                      kbuf_ref, vbuf_ref,
                      *, tn, max_deg):
    base = pl.program_id(0) * (tn * max_deg)

    def per_node(n, carry):
        row0 = pl.multiple_of(n * max_deg, 8)

        # gather the (<= max_deg) neighbour K / V rows of this dst node
        def gather(j, c):
            idx = nbr_ref[base + row0 + j]
            kbuf_ref[pl.ds(j, 1), :] = k_ref[pl.ds(idx, 1), :]
            vbuf_ref[pl.ds(j, 1), :] = v_ref[pl.ds(idx, 1), :]
            return c

        jax.lax.fori_loop(0, max_deg, gather, 0, unroll=True)

        q_n = q_ref[pl.ds(n, 1), :]                                   # (1, D)
        prod = kbuf_ref[...] * q_n                                    # (deg, D)
        # per-head dot product  s[j, h] = sum_d q[h,d] * k[j,h,d]
        s = jnp.dot(prod, hsum_ref[...],
                    preferred_element_type=jnp.float32)               # (deg, H)
        s = s * pri_ref[...]                                          # * pri / sqrt_dk

        msk = jnp.broadcast_to(mask_ref[pl.ds(row0, max_deg), :], s.shape)
        s = jnp.where(msk > 0.0, s, -1e30)

        # edge_softmax over this destination's in-edges (per-dst max -> stable)
        m = jnp.max(s, axis=0, keepdims=True)                         # (1, H)
        p = jnp.exp(s - m) * msk                                      # (deg, H)
        denom = jnp.sum(p, axis=0, keepdims=True)                     # (1, H)
        alpha = p / jnp.maximum(denom, 1e-30)                         # (deg, H)

        # message aggregation: broadcast alpha over each head's d_k lanes
        alpha_b = jnp.dot(alpha, expand_ref[...],
                          preferred_element_type=jnp.float32)         # (deg, D)
        t_n = jnp.sum(alpha_b * vbuf_ref[...], axis=0, keepdims=True)  # (1, D)
        t_ref[pl.ds(n, 1), :] = t_n
        return carry

    jax.lax.fori_loop(0, tn, per_node, 0)


def relation_attention(nbr_flat, mask_flat, k_src, v_src, q_dst, pri,
                       hsum, expand, *, tn, max_deg):
    n_dst_pad, d_model = q_dst.shape
    assert n_dst_pad % tn == 0
    assert nbr_flat.shape[0] == n_dst_pad * max_deg
    kernel = functools.partial(_edge_attn_kernel, tn=tn, max_deg=max_deg)
    return pl.pallas_call(
        kernel,
        out_shape=jax.ShapeDtypeStruct((n_dst_pad, d_model), jnp.float32),
        grid_spec=pltpu.PrefetchScalarGridSpec(
            num_scalar_prefetch=1,
            grid=(n_dst_pad // tn,),
            in_specs=[
                pl.BlockSpec(k_src.shape, lambda i, nbr: (0, 0)),
                pl.BlockSpec(v_src.shape, lambda i, nbr: (0, 0)),
                pl.BlockSpec((tn, d_model), lambda i, nbr: (i, 0)),
                pl.BlockSpec(pri.shape, lambda i, nbr: (0, 0)),
                pl.BlockSpec((tn * max_deg, 1), lambda i, nbr: (i, 0)),
                pl.BlockSpec(hsum.shape, lambda i, nbr: (0, 0)),
                pl.BlockSpec(expand.shape, lambda i, nbr: (0, 0)),
            ],
            out_specs=pl.BlockSpec((tn, d_model), lambda i, nbr: (i, 0)),
            scratch_shapes=[pltpu.VMEM((max_deg, d_model), jnp.float32),
                            pltpu.VMEM((max_deg, d_model), jnp.float32)],
        ),
        compiler_params=pltpu.CompilerParams(
            dimension_semantics=("parallel",),
            vmem_limit_bytes=64 * 1024 * 1024),
    )(nbr_flat, k_src, v_src, q_dst, pri, mask_flat, hsum, expand)


# ----------------------------------------------------------------------------
# Kernel 3: target-specific aggregation
#   t = mean_r t_r ; out = sigmoid(skip)*a_linear(t) + (1-sig)*h ; [LayerNorm]
# ----------------------------------------------------------------------------
def _out_kernel(t_ref, h_ref, wa_ref, ba_ref, sig_ref, gam_ref, bet_ref, o_ref,
                *, num_rel, use_norm):
    t = t_ref[0]
    for r in range(1, num_rel):
        t = t + t_ref[r]
    t = t * (1.0 / num_rel)                      # cross_reducer='mean'
    trans = jnp.dot(t.astype(jnp.bfloat16), wa_ref[...],
                    preferred_element_type=jnp.float32) + ba_ref[...]
    # TODO(synk): nn.Dropout(0.2) skipped (inference identity).
    sig = sig_ref[...]
    out = trans * sig + h_ref[...] * (1.0 - sig)
    if use_norm:
        mu = jnp.mean(out, axis=-1, keepdims=True)
        var = jnp.mean(jnp.square(out - mu), axis=-1, keepdims=True)
        out = (out - mu) * jax.lax.rsqrt(var + 1e-5) * gam_ref[...] + bet_ref[...]
    o_ref[...] = out


def aggregate_output(t_stack, h_pad, wa_bf16, ba, sig_vec, gamma, beta,
                     *, use_norm, tm=8):
    num_rel, n_pad, d = t_stack.shape
    din = h_pad.shape[1]
    assert n_pad % tm == 0
    kernel = functools.partial(_out_kernel, num_rel=num_rel, use_norm=use_norm)
    return pl.pallas_call(
        kernel,
        out_shape=jax.ShapeDtypeStruct((n_pad, d), jnp.float32),
        grid_spec=pltpu.PrefetchScalarGridSpec(
            num_scalar_prefetch=0,
            grid=(n_pad // tm,),
            in_specs=[pl.BlockSpec((num_rel, tm, d), lambda i: (0, i, 0)),
                      pl.BlockSpec((tm, din), lambda i: (i, 0)),
                      pl.BlockSpec((d, d), lambda i: (0, 0)),
                      pl.BlockSpec((1, d), lambda i: (0, 0)),
                      pl.BlockSpec((1, d), lambda i: (0, 0)),
                      pl.BlockSpec((1, d), lambda i: (0, 0)),
                      pl.BlockSpec((1, d), lambda i: (0, 0))],
            out_specs=pl.BlockSpec((tm, d), lambda i: (i, 0))),
        compiler_params=pltpu.CompilerParams(
            dimension_semantics=("parallel",),
            vmem_limit_bytes=64 * 1024 * 1024),
    )(t_stack, h_pad, wa_bf16, ba, sig_vec, gamma, beta)


# ----------------------------------------------------------------------------
# Parameter construction (mirrors HGTLayer.__init__)
# ----------------------------------------------------------------------------
def make_hgt_params(key, in_dim, out_dim, num_types, num_relations, n_heads):
    d_k = out_dim // n_heads
    keys = iter(jax.random.split(key, 8 * num_types + 1))

    def lin(fan_in, fan_out):
        bound = 1.0 / math.sqrt(fan_in)
        w = jax.random.uniform(next(keys), (fan_out, fan_in), jnp.float32,
                               -bound, bound)
        b = jax.random.uniform(next(keys), (fan_out,), jnp.float32,
                               -bound, bound)
        return w, b

    p = dict(k_w=[], k_b=[], q_w=[], q_b=[], v_w=[], v_b=[],
             a_w=[], a_b=[], ln_g=[], ln_b=[])
    for _ in range(num_types):
        for name in ("k", "q", "v"):
            w, b = lin(in_dim, out_dim)
            p[name + "_w"].append(w)
            p[name + "_b"].append(b)
        w, b = lin(out_dim, out_dim)
        p["a_w"].append(w)
        p["a_b"].append(b)
        p["ln_g"].append(jnp.ones((out_dim,), jnp.float32))
        p["ln_b"].append(jnp.zeros((out_dim,), jnp.float32))

    def xavier(k, shape):
        fan_in, fan_out = shape[-2], shape[-1]
        a = math.sqrt(6.0 / (fan_in + fan_out))
        return jax.random.uniform(k, shape, jnp.float32, -a, a)

    k1, k2 = jax.random.split(next(keys))
    p["rel_pri"] = jnp.ones((num_relations, n_heads), jnp.float32)
    p["rel_att"] = xavier(k1, (num_relations, n_heads, d_k, d_k))
    p["rel_msg"] = xavier(k2, (num_relations, n_heads, d_k, d_k))
    p["skip"] = jnp.ones((num_types,), jnp.float32)
    return p


def _fold(w_lin, b_lin, rel_mat, n_heads, d_k):
    """Fold relation_att / relation_msg into the (typed) linear weights."""
    in_dim = w_lin.shape[1]
    wt = w_lin.T.reshape(in_dim, n_heads, d_k)
    w_f = jnp.einsum("ihj,hjk->ihk", wt, rel_mat).reshape(in_dim, n_heads * d_k)
    b_f = jnp.einsum("hj,hjk->hk", b_lin.reshape(n_heads, d_k),
                     rel_mat).reshape(-1)
    return w_f, b_f


# ----------------------------------------------------------------------------
# Graph preprocessing: padded per-destination neighbour tables (host / NumPy)
# ----------------------------------------------------------------------------
def _build_neighbor_table(src_ids, dst_ids, n_dst, *, tn=8, min_deg=8):
    deg = np.zeros(n_dst, np.int64)
    for d in dst_ids:
        deg[int(d)] += 1
    max_deg = int(deg.max()) if deg.size and deg.max() > 0 else 1
    max_deg = max(min_deg, int(-(-max_deg // 8) * 8))
    n_pad = int(-(-n_dst // tn) * tn)
    nbr = np.zeros((n_pad, max_deg), np.int32)
    msk = np.zeros((n_pad, max_deg), np.float32)
    fill = np.zeros(n_dst, np.int64)
    for s, d in zip(src_ids, dst_ids):
        s, d = int(s), int(d)
        nbr[d, fill[d]] = s
        msk[d, fill[d]] = 1.0
        fill[d] += 1
    return jnp.asarray(nbr.reshape(-1)), jnp.asarray(msk.reshape(-1, 1)), max_deg


def build_graph(ntypes, counts, canonical_etypes, edges, *, node_tile=8):
    relations = []
    for e_id, cet in enumerate(canonical_etypes):
        src_t, _, dst_t = cet
        src_ids, dst_ids = edges[cet]
        nbr, msk, max_deg = _build_neighbor_table(
            np.asarray(src_ids), np.asarray(dst_ids), counts[dst_t],
            tn=node_tile)
        relations.append(dict(src=src_t, dst=dst_t, e_id=e_id,
                              nbr_idx=nbr, nbr_mask=msk, max_deg=max_deg))
    return dict(ntypes=list(ntypes), relations=relations)


# ----------------------------------------------------------------------------
# Full HGTLayer forward
# ----------------------------------------------------------------------------
def hgt_layer_forward(h_dict, params, graph, *, n_heads, use_norm=False,
                      node_tile=8):
    ntypes = graph["ntypes"]
    relations = graph["relations"]
    out_dim = params["q_w"][0].shape[0]
    d_k = out_dim // n_heads
    sqrt_dk = math.sqrt(d_k)

    # tiny constant helper matrices (per-head sum / per-head lane broadcast)
    eye_h = jnp.eye(n_heads, dtype=jnp.float32)
    expand = jnp.kron(eye_h, jnp.ones((1, d_k), jnp.float32))   # (H, out_dim)
    hsum = expand.T                                             # (out_dim, H)

    h_pad, n_real = {}, {}
    for nt in ntypes:
        n_real[nt] = h_dict[nt].shape[0]
        h_pad[nt] = _pad_rows(h_dict[nt], node_tile)

    # ---- fused per-ntype projections  [Q | K_r V_r ...] -----------------
    q_proj, kv_proj = {}, {}
    for t_id, nt in enumerate(ntypes):
        w_cols = [params["q_w"][t_id].T]
        b_cols = [params["q_b"][t_id]]
        offsets = {}
        off = out_dim
        for rel in relations:
            if rel["src"] != nt:
                continue
            wk, bk = _fold(params["k_w"][t_id], params["k_b"][t_id],
                           params["rel_att"][rel["e_id"]], n_heads, d_k)
            wv, bv = _fold(params["v_w"][t_id], params["v_b"][t_id],
                           params["rel_msg"][rel["e_id"]], n_heads, d_k)
            w_cols += [wk, wv]
            b_cols += [bk, bv]
            offsets[rel["e_id"]] = off
            off += 2 * out_dim
        w_big = jnp.concatenate(w_cols, axis=1).astype(jnp.bfloat16)
        b_big = jnp.concatenate(b_cols)[None, :]
        proj = fused_projection(h_pad[nt], w_big, b_big, tm=node_tile)
        q_proj[nt] = proj[:, :out_dim]
        for e_id, o in offsets.items():
            kv_proj[e_id] = (proj[:, o:o + out_dim],
                             proj[:, o + out_dim:o + 2 * out_dim])

    # ---- per-relation edge attention + aggregation ----------------------
    t_per_ntype = {nt: [] for nt in ntypes}
    for rel in relations:
        k_r, v_r = kv_proj[rel["e_id"]]
        pri = (params["rel_pri"][rel["e_id"]] / sqrt_dk)[None, :]
        t_r = relation_attention(
            rel["nbr_idx"], rel["nbr_mask"], k_r, v_r, q_proj[rel["dst"]],
            pri, hsum, expand, tn=node_tile, max_deg=rel["max_deg"])
        t_per_ntype[rel["dst"]].append(t_r)

    # ---- target-specific aggregation + skip (+ LayerNorm) ---------------
    new_h = {}
    for t_id, nt in enumerate(ntypes):
        t_list = t_per_ntype[nt]
        assert t_list, f"node type {nt} receives no relation"
        t_stack = jnp.stack(t_list, axis=0)                  # (R_nt, Npad, D)
        sig = jax.nn.sigmoid(params["skip"][t_id])
        sig_vec = sig * jnp.ones((1, out_dim), jnp.float32)
        out_pad = aggregate_output(
            t_stack, h_pad[nt],
            params["a_w"][t_id].T.astype(jnp.bfloat16),
            params["a_b"][t_id][None, :],
            sig_vec,
            params["ln_g"][t_id][None, :],
            params["ln_b"][t_id][None, :],
            use_norm=use_norm, tm=node_tile)
        new_h[nt] = out_pad[:n_real[nt]]
    return new_h


# ----------------------------------------------------------------------------
# demo
# ----------------------------------------------------------------------------
if __name__ == "__main__":
    key = jax.random.PRNGKey(0)

    ntypes = ["paper", "author"]                 # node_dict order -> type id
    counts = {"paper": 20, "author": 12}
    canonical_etypes = [("paper", "cites", "paper"),
                        ("author", "writes", "paper"),
                        ("paper", "written-by", "author")]
    in_dim = out_dim = 128                       # skip connection needs equal dims
    n_heads = 4
    num_types = len(ntypes)
    num_relations = len(canonical_etypes)

    k_feat, k_param, k_edges = jax.random.split(key, 3)
    kf = jax.random.split(k_feat, num_types)
    h_dict = {nt: jax.random.normal(kf[i], (counts[nt], in_dim), jnp.float32)
              for i, nt in enumerate(ntypes)}

    edge_counts = {("paper", "cites", "paper"): 64,
                   ("author", "writes", "paper"): 48,
                   ("paper", "written-by", "author"): 48}
    ke = jax.random.split(k_edges, 2 * num_relations)
    edges = {}
    for i, cet in enumerate(canonical_etypes):
        src_t, _, dst_t = cet
        e = edge_counts[cet]
        src = jax.random.randint(ke[2 * i], (e,), 0, counts[src_t])
        dst = jax.random.randint(ke[2 * i + 1], (e,), 0, counts[dst_t])
        edges[cet] = (np.asarray(src), np.asarray(dst))

    graph = build_graph(ntypes, counts, canonical_etypes, edges, node_tile=8)
    params = make_hgt_params(k_param, in_dim, out_dim, num_types,
                             num_relations, n_heads)

    new_h = hgt_layer_forward(h_dict, params, graph, n_heads=n_heads,
                              use_norm=True)
    new_h = jax.block_until_ready(new_h)

    assert new_h["paper"].shape == (counts["paper"], out_dim)
    assert new_h["author"].shape == (counts["author"], out_dim)
    assert all(bool(jnp.all(jnp.isfinite(v))) for v in new_h.values())
    print("KERNEL_OK")
</pallas_src>

<mosaic_0001>
module attributes {stable_mosaic.version = 11 : i64} {
  func.func @_proj_kernel(%arg0: i32, %arg1: memref<8x128xf32, #tpu.memory_space<vmem>>, %arg2: memref<128x640xbf16, #tpu.memory_space<vmem>>, %arg3: memref<1x640xf32, #tpu.memory_space<vmem>>, %arg4: memref<8x640xf32, #tpu.memory_space<vmem>>) attributes {dimension_semantics = [#tpu.dimension_semantics<parallel>], iteration_bounds = array<i64: 3>, scalar_prefetch = 0 : i64, scratch_operands = 0 : i64, tpu.core_type = #tpu.core_type<tc>, window_params = [{transform_indices = @transform_0, window_bounds = array<i64: 8, 128>}, {pipeline_mode = #tpu.pipeline_mode<synchronous>, transform_indices = @transform_1, window_bounds = array<i64: 128, 640>}, {pipeline_mode = #tpu.pipeline_mode<synchronous>, transform_indices = @transform_2, window_bounds = array<i64: 1, 640>}, {transform_indices = @transform_3, window_bounds = array<i64: 8, 640>}]} {
    %c0 = arith.constant 0 : index
    %c0_0 = arith.constant 0 : index
    %0 = vector.load %arg1[%c0, %c0_0] : memref<8x128xf32, #tpu.memory_space<vmem>>, vector<8x128xf32>
    %1 = arith.truncf %0 : vector<8x128xf32> to vector<8x128xbf16>
    %c0_1 = arith.constant 0 : index
    %c0_2 = arith.constant 0 : index
    %2 = vector.load %arg2[%c0_1, %c0_2] : memref<128x640xbf16, #tpu.memory_space<vmem>>, vector<128x640xbf16>
    %cst = arith.constant dense<0.000000e+00> : vector<8x640xf32>
    %3 = tpu.matmul %1, %2, %cst {dimension_numbers = #tpu.dot_dimension_numbers<[1], [0], [0], [1], [0, 0, 1, 1], [], []>} : vector<8x128xbf16>, vector<128x640xbf16>, vector<8x640xf32> -> vector<8x640xf32>
    %c0_3 = arith.constant 0 : index
    %c0_4 = arith.constant 0 : index
    %4 = vector.load %arg3[%c0_3, %c0_4] : memref<1x640xf32, #tpu.memory_space<vmem>>, vector<1x640xf32>
    %5 = vector.broadcast %4 : vector<1x640xf32> to vector<8x640xf32>
    %6 = arith.addf %3, %5 : vector<8x640xf32>
    %c0_5 = arith.constant 0 : index
    %c0_6 = arith.constant 0 : index
    %7 = vector.load %arg4[%c0_5, %c0_6] : memref<8x640xf32, #tpu.memory_space<vmem>>, vector<8x640xf32>
    tpu.vector_store %arg4[%c0_5, %c0_6], %6 {strides = array<i32>} : memref<8x640xf32, #tpu.memory_space<vmem>>, vector<8x640xf32>,
    return
  }
  func.func @transform_0(%arg0: i32) -> (i32, i32) {
    %c0_i32 = arith.constant 0 : i32
    %c0_i32_0 = arith.constant 0 : i32
    return %arg0, %c0_i32 : i32, i32
  }
  func.func @transform_1(%arg0: i32) -> (i32, i32) {
    %c0_i32 = arith.constant 0 : i32
    %c0_i32_0 = arith.constant 0 : i32
    %c0_i32_1 = arith.constant 0 : i32
    return %c0_i32, %c0_i32_0 : i32, i32
  }
  func.func @transform_2(%arg0: i32) -> (i32, i32) {
    %c0_i32 = arith.constant 0 : i32
    %c0_i32_0 = arith.constant 0 : i32
    %c0_i32_1 = arith.constant 0 : i32
    return %c0_i32, %c0_i32_0 : i32, i32
  }
  func.func @transform_3(%arg0: i32) -> (i32, i32) {
    %c0_i32 = arith.constant 0 : i32
    %c0_i32_0 = arith.constant 0 : i32
    return %arg0, %c0_i32 : i32, i32
  }
}

</mosaic_0001>

<llo_original>
// kernel: tpu_custom_call.1
$region0: #{tpu_custom_call.1}
  #allocation0 [shape = 'u32[]', space=smem, size = 0x4, offset = 0x4, fixed_abs, tag = 'smem constant byte address 0x4 - core index']
  #allocation1 [shape = 'u32[144,128]{1,0:T(1,128)}', space=vmem, size = 0x12000, scoped, tag = 'internal scratch']
  %s0 = inlined_call_operand.hbm [shape: f32[24,128], index: 0, kind: input, shape index: {}]
  %s1 = inlined_call_operand.hbm [shape: bf16[128,640], index: 1, kind: input, shape index: {}]
  %s2 = inlined_call_operand.hbm [shape: f32[1,640], index: 2, kind: input, shape index: {}]
  %s3 = inlined_call_operand.hbm [shape: f32[24,640], index: 3, kind: output, shape index: {}]
  %s4 = sld [smem:[#allocation0]]
  $region57: #{tpu_custom_call.1} parent=0
    _
  %s6 = ssub.s32 1, %s4
  %s7 = scalar_select 0, %s6, %s4
  $region1: #{tpu_custom_call.1} parent=0
    #allocation2 [shape = 'u8[8192]{0}', space=vmem, size = 0x2000, scoped, tag = 'input window, operand 0']
    #allocation3 [shape = 's32[2]{0}', space=sflag, size = 0x8, scoped, tag = 'scoped memory for tpu_custom_call.1']
    #allocation4 [shape = 's32[2]{0}', space=sflag, size = 0x8, scoped, tag = 'scoped memory for tpu_custom_call.1']
    #allocation5 [shape = 'u8[163840]{0}', space=vmem, size = 0x28000, scoped, tag = 'input window, operand 1, single buffered']
    #allocation6 [shape = 's32[1]{0}', space=sflag, size = 0x4, scoped, tag = 'scoped memory for tpu_custom_call.1']
    #allocation7 [shape = 'u8[2560]{0}', space=vmem, size = 0xc00, scoped, tag = 'input window, operand 2, single buffered']
    #allocation8 [shape = 'u8[40960]{0}', space=vmem, size = 0xa000, scoped, tag = 'output window, operand 0']
    %8 = vsyncpa [#allocation3], 0
    %s9 = scalar_lea.sflag [#allocation3], 1
    %10 = vsyncpa %s9, 0
    %11 = vsyncpa [#allocation6], 0
    %12 = vsyncpa [#allocation4], 0
    %s13 = scalar_lea.sflag [#allocation4], 1
    %14 = vsyncpa %s13, 0
    loop: start=0, step=1, limit=5
    $region2: #{tpu_custom_call.1} parent=1 // loop_pre_header
      _
    $region3: #{tpu_custom_call.1} parent=1 // loop_header
      %s16 = sphi 0, %s20
      %p17 = scmp.ge.s32.totalorder %s16, 5
      %s26 = sphi 0, %s28
      %s29 = sphi 0, %s26
      %s30 = sphi 0, %s29
      %s46 = sphi 0, %s30
      %s50 = sphi 0, %s50
      %s52 = sphi 0, %s50
      %s53 = sphi 0, %s52
      %s67 = sphi 0, %s53
      %s71 = sphi 0, %s71
      %s73 = sphi 0, %s71
      %s74 = sphi 0, %s73
      %s88 = sphi 0, %s74
      %s94 = sphi 0, %s96
      %s97 = sphi 0, %s94
      %s98 = sphi 0, %s97
      %s114 = sphi 0, %s98
    $region4: #{tpu_custom_call.1} parent=1 // loop_header_branch
      %19 = sbr.rel (%p17) target = $region8
    $region5: #{tpu_custom_call.1} parent=1 // loop_body
      %s21 = ssub.s32 %s16, 1
      %s22 = ssub.s32 %s16, 2
      %s23 = sadd.s32 %s16, 1
      %s24 = ssub.s32 %s16, %s23
      %p25 = scmp.eq.s32.totalorder %s24, 0
      %s27 = sadd.s32 %s26, 1
      %s28 = scalar_select %p25, %s26, %s27
      %p31 = pneg %p25
      %p32 = scmp.eq.s32.totalorder %s16, 2
      %p33 = por %p31, %p32
      %p34 = scmp.ne.s32.totalorder %s26, %s29
      %p35 = scmp.eq.s32.totalorder %s16, 0
      %p36 = por %p34, %p35
      %p37 = scmp.ne.s32.totalorder %s26, %s29
      %p38 = scmp.eq.s32.totalorder %s21, 2
      %p39 = por %p37, %p38
      %p40 = scmp.ne.s32.totalorder %s29, %s30
      %p41 = scmp.eq.s32.totalorder %s21, 0
      %p42 = por %p40, %p41
      %p43 = scmp.ne.s32.totalorder %s29, %s30
      %p44 = scmp.eq.s32.totalorder %s22, 2
      %p45 = por %p43, %p44
      %p47 = scmp.ne.s32.totalorder %s30, %s46
      %p48 = scmp.eq.s32.totalorder %s22, 0
      %p49 = por %p47, %p48
      %s51 = sadd.s32 %s50, 1
      %p54 = scmp.eq.s32.totalorder %s16, 2
      %p55 = scmp.ne.s32.totalorder %s50, %s52
      %p56 = scmp.eq.s32.totalorder %s16, 0
      %p57 = por %p55, %p56
      %p58 = scmp.ne.s32.totalorder %s50, %s52
      %p59 = scmp.eq.s32.totalorder %s21, 2
      %p60 = por %p58, %p59
      %p61 = scmp.ne.s32.totalorder %s52, %s53
      %p62 = scmp.eq.s32.totalorder %s21, 0
      %p63 = por %p61, %p62
      %p64 = scmp.ne.s32.totalorder %s52, %s53
      %p65 = scmp.eq.s32.totalorder %s22, 2
      %p66 = por %p64, %p65
      %p68 = scmp.ne.s32.totalorder %s53, %s67
      %p69 = scmp.eq.s32.totalorder %s22, 0
      %p70 = por %p68, %p69
      %s72 = sadd.s32 %s71, 1
      %p75 = scmp.eq.s32.totalorder %s16, 2
      %p76 = scmp.ne.s32.totalorder %s71, %s73
      %p77 = scmp.eq.s32.totalorder %s16, 0
      %p78 = por %p76, %p77
      %p79 = scmp.ne.s32.totalorder %s71, %s73
      %p80 = scmp.eq.s32.totalorder %s21, 2
      %p81 = por %p79, %p80
      %p82 = scmp.ne.s32.totalorder %s73, %s74
      %p83 = scmp.eq.s32.totalorder %s21, 0
      %p84 = por %p82, %p83
      %p85 = scmp.ne.s32.totalorder %s73, %s74
      %p86 = scmp.eq.s32.totalorder %s22, 2
      %p87 = por %p85, %p86
      %p89 = scmp.ne.s32.totalorder %s74, %s88
      %p90 = scmp.eq.s32.totalorder %s22, 0
      %p91 = por %p89, %p90
      %s92 = ssub.s32 %s16, %s23
      %p93 = scmp.eq.s32.totalorder %s92, 0
      %s95 = sadd.s32 %s94, 1
      %s96 = scalar_select %p93, %s94, %s95
      %p99 = pneg %p93
      %p100 = scmp.eq.s32.totalorder %s16, 2
      %p101 = por %p99, %p100
      %p102 = scmp.ne.s32.totalorder %s94, %s97
      %p103 = scmp.eq.s32.totalorder %s16, 0
      %p104 = por %p102, %p103
      %p105 = scmp.ne.s32.totalorder %s94, %s97
      %p106 = scmp.eq.s32.totalorder %s21, 2
      %p107 = por %p105, %p106
      %p108 = scmp.ne.s32.totalorder %s97, %s98
      %p109 = scmp.eq.s32.totalorder %s21, 0
      %p110 = por %p108, %p109
      %p111 = scmp.ne.s32.totalorder %s97, %s98
      %p112 = scmp.eq.s32.totalorder %s22, 2
      %p113 = por %p111, %p112
      %p115 = scmp.ne.s32.totalorder %s98, %s114
      %p116 = scmp.eq.s32.totalorder %s22, 0
      %p117 = por %p115, %p116
      %p118 = scmp.le.s32.totalorder 1, %s16
      %p119 = scmp.lt.s32.totalorder %s16, 4
      %p120 = pnand %p118, %p119
      %p121 = pneg %p120
      // Predicated region
      $region9: #{tpu_custom_call.1} parent=5 // pred_check
        _
      $region10: #{tpu_custom_call.1} parent=5 // pred_check_branch
        %123 = sbr.rel (%p120) target = $region12
      $region11: #{tpu_custom_call.1} parent=5 // pred_region
        %s124 = ssub.s32 %s16, 1
        // Predicated region
        $region13: #{tpu_custom_call.1} parent=11 // pred_check
          %p125 = pneg %p63
        $region14: #{tpu_custom_call.1} parent=11 // pred_check_branch
          %127 = sbr.rel (%p125) target = $region16
        $region15: #{tpu_custom_call.1} parent=11 // pred_region
          %s129 = ssub.s32 5120, 5120
          %130 = vsyncadd [#allocation6], %s129
          %s131 = sshll.u32 [#allocation5], 4
          %s132 = int_to_ptr.vmem [resolvable:$true] %s131
          %137 = dma.hbm_to_vmem [thread:$0]  %s1, 5120, %s132, [#allocation6], 320, 320, 20
        $region16: #{tpu_custom_call.1} parent=11 // pred_fallthru
          _
        // Predicated region
        $region17: #{tpu_custom_call.1} parent=11 // pred_check
          %p138 = pneg %p84
        $region18: #{tpu_custom_call.1} parent=11 // pred_check_branch
          %140 = sbr.rel (%p138) target = $region20
        $region19: #{tpu_custom_call.1} parent=11 // pred_region
          %s142 = ssub.s32 80, 80
          %143 = vsyncadd [#allocation6], %s142
          %s145 = sshll.u32 [#allocation7], 4
          %s146 = int_to_ptr.vmem [resolvable:$true] %s145
          %148 = dma.hbm_to_vmem [thread:$0]  %s2, 80, %s146, [#allocation6]
        $region20: #{tpu_custom_call.1} parent=11 // pred_fallthru
          _
      $region12: #{tpu_custom_call.1} parent=5 // pred_fallthru
        _
      %p149 = scmp.lt.s32.totalorder %s16, 3
      // Predicated region
      $region21: #{tpu_custom_call.1} parent=5 // pred_check
        %p150 = pneg %p149
      $region22: #{tpu_custom_call.1} parent=5 // pred_check_branch
        %152 = sbr.rel (%p150) target = $region24
      $region23: #{tpu_custom_call.1} parent=5 // pred_region
        // Predicated region
        $region25: #{tpu_custom_call.1} parent=23 // pred_check
          %p153 = pneg %p36
        $region26: #{tpu_custom_call.1} parent=23 // pred_check_branch
          %155 = sbr.rel (%p153) target = $region28
        $region27: #{tpu_custom_call.1} parent=23 // pred_region
          %s156 = sand.u32 %s26, 1
          %s157 = scalar_lea.sflag [#allocation3], %s156
          %s158 = sand.u32 %s26, 1
          %s159 = smul.addr %s158, 8
          %s160 = scalar_lea.vmem [#allocation2], %s159
          %s162 = ssub.s32 128, 128
          %163 = vsyncadd %s157, %s162
          %s164 = smul.addr %s16, 128
          %s165 = scalar_lea.hbm %s0, %s164
          %s167 = sshll.u32 %s160, 4
          %s168 = int_to_ptr.vmem [resolvable:$true] %s167
          %170 = dma.hbm_to_vmem [thread:$0]  %s165, 128, %s168, %s157
        $region28: #{tpu_custom_call.1} parent=23 // pred_fallthru
          _
      $region24: #{tpu_custom_call.1} parent=5 // pred_fallthru
        _
      %p171 = scmp.le.s32.totalorder 1, %s16
      %p172 = scmp.lt.s32.totalorder %s16, 4
      %p173 = pnand %p171, %p172
      %p174 = pneg %p173
      // Predicated region
      $region29: #{tpu_custom_call.1} parent=5 // pred_check
        _
      $region30: #{tpu_custom_call.1} parent=5 // pred_check_branch
        %176 = sbr.rel (%p173) target = $region32
      $region31: #{tpu_custom_call.1} parent=5 // pred_region
        %s177 = ssub.s32 %s16, 1
        %s178 = sand.u32 %s29, 1
        %s179 = scalar_lea.sflag [#allocation3], %s178
        %s180 = sand.u32 %s29, 1
        %s181 = smul.addr %s180, 8
        %s182 = scalar_lea.vmem [#allocation2], %s181
        // Predicated region
        $region33: #{tpu_custom_call.1} parent=31 // pred_check
          %p183 = pneg %p42
        $region34: #{tpu_custom_call.1} parent=31 // pred_check_branch
          %185 = sbr.rel (%p183) target = $region36
        $region35: #{tpu_custom_call.1} parent=31 // pred_region
          %186 = dma.done %s179, 128
        $region36: #{tpu_custom_call.1} parent=31 // pred_fallthru
          _
        // Predicated region
        $region37: #{tpu_custom_call.1} parent=31 // pred_check
          %p187 = pneg %p63
        $region38: #{tpu_custom_call.1} parent=31 // pred_check_branch
          %189 = sbr.rel (%p187) target = $region40
        $region39: #{tpu_custom_call.1} parent=31 // pred_region
          %190 = dma.done [#allocation6], 5120
        $region40: #{tpu_custom_call.1} parent=31 // pred_fallthru
          _
        // Predicated region
        $region41: #{tpu_custom_call.1} parent=31 // pred_check
          %p191 = pneg %p84
        $region42: #{tpu_custom_call.1} parent=31 // pred_check_branch
          %193 = sbr.rel (%p191) target = $region44
        $region43: #{tpu_custom_call.1} parent=31 // pred_region
          %194 = dma.done [#allocation6], 80
        $region44: #{tpu_custom_call.1} parent=31 // pred_fallthru
          _
        %s195 = sand.u32 %s29, 1
        %s196 = scalar_lea.sflag [#allocation3], %s195
        %s197 = sand.u32 %s29, 1
        %s198 = smul.addr %s197, 8
        %s199 = scalar_lea.vmem [#allocation2], %s198
        %p200 = pneg %p42
        %p201 = pneg %p39
        %p202 = pneg %p63
        %p203 = pneg %p60
        %p204 = pneg %p84
        %p205 = pneg %p81
        %p206 = pneg %p110
        %p207 = pneg %p107
        %s208 = sand.u32 %s97, 1
        %s209 = scalar_lea.sflag [#allocation4], %s208
        %s210 = sand.u32 %s97, 1
        %s211 = smul.addr %s210, 40
        %s212 = scalar_lea.vmem [#allocation8], %s211
        %v214 = vld [vmem:[%s182] sm:$0xff]
        %v215 = vpack.c.bf16 %v214, %v214
        %v216 = vld [vmem:[#allocation5] sm:$0xff]
        %v217 = vld [vmem:[#allocation5 + $0x8] sm:$0xff]
        %v218 = vld [vmem:[#allocation5 + $0x10] sm:$0xf]
        %v219 = vld [vmem:[#allocation5 + $0x14] sm:$0xff]
        %v220 = vld [vmem:[#allocation5 + $0x1c] sm:$0xff]
        %v221 = vld [vmem:[#allocation5 + $0x24] sm:$0xf]
        %v222 = vld [vmem:[#allocation5 + $0x28] sm:$0xff]
        %v223 = vld [vmem:[#allocation5 + $0x30] sm:$0xff]
        %v224 = vld [vmem:[#allocation5 + $0x38] sm:$0xf]
        %v225 = vld [vmem:[#allocation5 + $0x3c] sm:$0xff]
        %v226 = vld [vmem:[#allocation5 + $0x44] sm:$0xff]
        %v227 = vld [vmem:[#allocation5 + $0x4c] sm:$0xf]
        %v228 = vld [vmem:[#allocation5 + $0x50] sm:$0xff]
        %v229 = vld [vmem:[#allocation5 + $0x58] sm:$0xff]
        %v230 = vld [vmem:[#allocation5 + $0x60] sm:$0xf]
        %v231 = vld [vmem:[#allocation5 + $0x64] sm:$0xff]
        %v232 = vld [vmem:[#allocation5 + $0x6c] sm:$0xff]
        %v233 = vld [vmem:[#allocation5 + $0x74] sm:$0xf]
        %v234 = vld [vmem:[#allocation5 + $0x78] sm:$0xff]
        %v235 = vld [vmem:[#allocation5 + $0x80] sm:$0xff]
        %v236 = vld [vmem:[#allocation5 + $0x88] sm:$0xf]
        %v237 = vld [vmem:[#allocation5 + $0x8c] sm:$0xff]
        %v238 = vld [vmem:[#allocation5 + $0x94] sm:$0xff]
        %v239 = vld [vmem:[#allocation5 + $0x9c] sm:$0xf]
        %v240 = vld [vmem:[#allocation5 + $0xa0] sm:$0xff]
        %v241 = vld [vmem:[#allocation5 + $0xa8] sm:$0xff]
        %v242 = vld [vmem:[#allocation5 + $0xb0] sm:$0xf]
        %v243 = vld [vmem:[#allocation5 + $0xb4] sm:$0xff]
        %v244 = vld [vmem:[#allocation5 + $0xbc] sm:$0xff]
        %v245 = vld [vmem:[#allocation5 + $0xc4] sm:$0xf]
        %v246 = vld [vmem:[#allocation5 + $0xc8] sm:$0xff]
        %v247 = vld [vmem:[#allocation5 + $0xd0] sm:$0xff]
        %v248 = vld [vmem:[#allocation5 + $0xd8] sm:$0xf]
        %v249 = vld [vmem:[#allocation5 + $0xdc] sm:$0xff]
        %v250 = vld [vmem:[#allocation5 + $0xe4] sm:$0xff]
        %v251 = vld [vmem:[#allocation5 + $0xec] sm:$0xf]
        %v252 = vld [vmem:[#allocation5 + $0xf0] sm:$0xff]
        %v253 = vld [vmem:[#allocation5 + $0xf8] sm:$0xff]
        %v254 = vld [vmem:[#allocation5 + $0x100] sm:$0xf]
        %v255 = vld [vmem:[#allocation5 + $0x104] sm:$0xff]
        %v256 = vld [vmem:[#allocation5 + $0x10c] sm:$0xff]
        %v257 = vld [vmem:[#allocation5 + $0x114] sm:$0xf]
        %v258 = vld [vmem:[#allocation5 + $0x118] sm:$0xff]
        %v259 = vld [vmem:[#allocation5 + $0x120] sm:$0xff]
        %v260 = vld [vmem:[#allocation5 + $0x128] sm:$0xf]
        %v261 = vld [vmem:[#allocation5 + $0x12c] sm:$0xff]
        %v262 = vld [vmem:[#allocation5 + $0x134] sm:$0xff]
        %v263 = vld [vmem:[#allocation5 + $0x13c] sm:$0xf]
        %v264 = vld [vmem:[#allocation7] sm:$0x1f]
        %v266 = vlaneseq
        %v267 = vshrl.u32 %v266, 7
        %v268 = vsub.s32 0, %v267
        %v269 = vrot.slane %v264, %v268
        %v270 = vlaneseq
        %v271 = vshrl.u32 %v270, 7
        %v272 = vsub.s32 1, %v271
        %v273 = vrot.slane %v264, %v272
        %v274 = vlaneseq
        %v275 = vshrl.u32 %v274, 7
        %v276 = vsub.s32 2, %v275
        %v277 = vrot.slane %v264, %v276
        %v278 = vlaneseq
        %v279 = vshrl.u32 %v278, 7
        %v280 = vsub.s32 3, %v279
        %v281 = vrot.slane %v264, %v280
        %v282 = vlaneseq
        %v283 = vshrl.u32 %v282, 7
        %v284 = vsub.s32 4, %v283
        %v285 = vrot.slane %v264, %v284
        %v339 = vunpack.c.l.b16 %v216
        %v340 = vunpack.c.h.b16 %v216
        %v341 = vunpack.c.l.b16 %v217
        %v342 = vunpack.c.h.b16 %v217
        %v343 = vunpack.c.l.b16 %v218
        %v344 = vunpack.c.l.b16 %v219
        %v345 = vunpack.c.h.b16 %v219
        %v346 = vunpack.c.l.b16 %v220
        %v347 = vunpack.c.h.b16 %v220
        %v348 = vunpack.c.l.b16 %v221
        %v349 = vunpack.c.l.b16 %v222
        %v350 = vunpack.c.h.b16 %v222
        %v351 = vunpack.c.l.b16 %v223
        %v352 = vunpack.c.h.b16 %v223
        %v353 = vunpack.c.l.b16 %v224
        %v354 = vunpack.c.l.b16 %v225
        %v355 = vunpack.c.h.b16 %v225
        %v356 = vunpack.c.l.b16 %v226
        %v357 = vunpack.c.h.b16 %v226
        %v358 = vunpack.c.l.b16 %v227
        %v359 = vunpack.c.l.b16 %v228
        %v360 = vunpack.c.h.b16 %v228
        %v361 = vunpack.c.l.b16 %v229
        %v362 = vunpack.c.h.b16 %v229
        %v363 = vunpack.c.l.b16 %v230
        %v364 = vunpack.c.l.b16 %v231
        %v365 = vunpack.c.h.b16 %v231
        %v366 = vunpack.c.l.b16 %v232
        %v367 = vunpack.c.h.b16 %v232
        %v368 = vunpack.c.l.b16 %v233
        %v369 = vunpack.c.l.b16 %v234
        %v370 = vunpack.c.h.b16 %v234
        %v371 = vunpack.c.l.b16 %v235
        %v372 = vunpack.c.h.b16 %v235
        %v373 = vunpack.c.l.b16 %v236
        %v374 = vunpack.c.l.b16 %v237
        %v375 = vunpack.c.h.b16 %v237
        %v376 = vunpack.c.l.b16 %v238
        %v377 = vunpack.c.h.b16 %v238
        %v378 = vunpack.c.l.b16 %v239
        %v379 = vunpack.c.l.b16 %v240
        %v380 = vunpack.c.h.b16 %v240
        %v381 = vunpack.c.l.b16 %v241
        %v382 = vunpack.c.h.b16 %v241
        %v383 = vunpack.c.l.b16 %v242
        %v384 = vunpack.c.l.b16 %v243
        %v385 = vunpack.c.h.b16 %v243
        %v386 = vunpack.c.l.b16 %v244
        %v387 = vunpack.c.h.b16 %v244
        %v388 = vunpack.c.l.b16 %v245
        %v389 = vunpack.c.l.b16 %v246
        %v390 = vunpack.c.h.b16 %v246
        %v391 = vunpack.c.l.b16 %v247
        %v392 = vunpack.c.h.b16 %v247
        %v393 = vunpack.c.l.b16 %v248
        %v394 = vunpack.c.l.b16 %v249
        %v395 = vunpack.c.h.b16 %v249
        %v396 = vunpack.c.l.b16 %v250
        %v397 = vunpack.c.h.b16 %v250
        %v398 = vunpack.c.l.b16 %v251
        %v399 = vunpack.c.l.b16 %v252
        %v400 = vunpack.c.h.b16 %v252
        %v401 = vunpack.c.l.b16 %v253
        %v402 = vunpack.c.h.b16 %v253
        %v403 = vunpack.c.l.b16 %v254
        %v404 = vunpack.c.l.b16 %v255
        %v405 = vunpack.c.h.b16 %v255
        %v406 = vunpack.c.l.b16 %v256
        %v407 = vunpack.c.h.b16 %v256
        %v408 = vunpack.c.l.b16 %v257
        %v409 = vunpack.c.l.b16 %v258
        %v410 = vunpack.c.h.b16 %v258
        %v411 = vunpack.c.l.b16 %v259
        %v412 = vunpack.c.h.b16 %v259
        %v413 = vunpack.c.l.b16 %v260
        %v414 = vunpack.c.l.b16 %v261
        %v415 = vunpack.c.h.b16 %v261
        %v416 = vunpack.c.l.b16 %v262
        %v417 = vunpack.c.h.b16 %v262
        %v418 = vunpack.c.l.b16 %v263
        %v419 = vpack.c.b16 %v344, %v339
        %v420 = vpack.c.b16 %v345, %v340
        %v421 = vpack.c.b16 %v346, %v341
        %v422 = vpack.c.b16 %v347, %v342
        %v423 = vpack.c.b16 %v348, %v343
        %v424 = vpack.c.b16 %v354, %v349
        %v425 = vpack.c.b16 %v355, %v350
        %v426 = vpack.c.b16 %v356, %v351
        %v427 = vpack.c.b16 %v357, %v352
        %v428 = vpack.c.b16 %v358, %v353
        %v429 = vpack.c.b16 %v364, %v359
        %v430 = vpack.c.b16 %v365, %v360
        %v431 = vpack.c.b16 %v366, %v361
        %v432 = vpack.c.b16 %v367, %v362
        %v433 = vpack.c.b16 %v368, %v363
        %v434 = vpack.c.b16 %v374, %v369
        %v435 = vpack.c.b16 %v375, %v370
        %v436 = vpack.c.b16 %v376, %v371
        %v437 = vpack.c.b16 %v377, %v372
        %v438 = vpack.c.b16 %v378, %v373
        %v439 = vpack.c.b16 %v384, %v379
        %v440 = vpack.c.b16 %v385, %v380
        %v441 = vpack.c.b16 %v386, %v381
        %v442 = vpack.c.b16 %v387, %v382
        %v443 = vpack.c.b16 %v388, %v383
        %v444 = vpack.c.b16 %v394, %v389
        %v445 = vpack.c.b16 %v395, %v390
        %v446 = vpack.c.b16 %v396, %v391
        %v447 = vpack.c.b16 %v397, %v392
        %v448 = vpack.c.b16 %v398, %v393
        %v449 = vpack.c.b16 %v404, %v399
        %v450 = vpack.c.b16 %v405, %v400
        %v451 = vpack.c.b16 %v406, %v401
        %v452 = vpack.c.b16 %v407, %v402
        %v453 = vpack.c.b16 %v408, %v403
        %v454 = vpack.c.b16 %v414, %v409
        %v455 = vpack.c.b16 %v415, %v410
        %v456 = vpack.c.b16 %v416, %v411
        %v457 = vpack.c.b16 %v417, %v412
        %v458 = vpack.c.b16 %v418, %v413
        %499 = vmatprep.subr.bf16.mxu0 %v420
        %500 = vmatpush1.bf16.msra.mxu0 %v419
        %501 = vmatprep.subr.bf16.mxu0 %v425
        %502 = vmatpush1.bf16.msra.mxu0 %v424
        %503 = vmatprep.subr.bf16.mxu0 %v430
        %504 = vmatpush1.bf16.msra.mxu0 %v429
        %505 = vmatprep.subr.bf16.mxu0 %v435
        %506 = vmatpush1.bf16.msra.mxu0 %v434
        %507 = vmatprep.subr.bf16.mxu0 %v440
        %508 = vmatpush1.bf16.msra.mxu0 %v439
        %509 = vmatprep.subr.bf16.mxu0 %v445
        %510 = vmatpush1.bf16.msra.mxu0 %v444
        %511 = vmatprep.subr.bf16.mxu0 %v450
        %512 = vmatpush1.bf16.msra.mxu0 %v449
        %513 = vmatprep.subr.bf16.mxu0 %v455
        %514 = vmatpush1.bf16.msra.mxu0 %v454
        %515 = vmatprep.subr.bf16.mxu0 0
        %516 = vmatpush1.bf16.msra.mxu0 0
        %517 = vmatprep.subr.bf16.mxu0 0
        %518 = vmatpush1.bf16.msra.mxu0 0
        %519 = vmatprep.subr.bf16.mxu0 0
        %520 = vmatpush1.bf16.msra.mxu0 0
        %521 = vmatprep.subr.bf16.mxu0 0
        %522 = vmatpush1.bf16.msra.mxu0 0
        %523 = vmatprep.subr.bf16.mxu0 0
        %524 = vmatpush1.bf16.msra.mxu0 0
        %525 = vmatprep.subr.bf16.mxu0 0
        %526 = vmatpush1.bf16.msra.mxu0 0
        %527 = vmatprep.subr.bf16.mxu0 0
        %528 = vmatpush1.bf16.msra.mxu0 0
        %529 = vmatprep.subr.bf16.mxu0 0
        %530 = vmatpush1.bf16.msra.mxu0 0
        %531 = vmatprep.mubr.bf16.mxu0 0
        %532 = vmatmul.mubr.bf16.gmra.mrb[0].mxu0 %v215
        %v533 = vpop.f32.mrb[0].mxu0
        %v534 = vadd.f32 %v269, %v533
        %v535 = vpop.f32.mrb[0].mxu0
        %v536 = vadd.f32 %v273, %v535
        %v537 = vpop.f32.mrb[0].mxu0
        %v538 = vpop.f32.mrb[0].mxu0
        %539 = vdwg.mxu0
        %540 = vmatprep.subr.bf16.mxu0 %v422
        %541 = vmatpush1.bf16.msra.mxu0 %v421
        %542 = vmatprep.subr.bf16.mxu0 %v427
        %543 = vmatpush1.bf16.msra.mxu0 %v426
        %544 = vmatprep.subr.bf16.mxu0 %v432
        %545 = vmatpush1.bf16.msra.mxu0 %v431
        %546 = vmatprep.subr.bf16.mxu0 %v437
        %547 = vmatpush1.bf16.msra.mxu0 %v436
        %548 = vmatprep.subr.bf16.mxu0 %v442
        %549 = vmatpush1.bf16.msra.mxu0 %v441
        %550 = vmatprep.subr.bf16.mxu0 %v447
        %551 = vmatpush1.bf16.msra.mxu0 %v446
        %552 = vmatprep.subr.bf16.mxu0 %v452
        %553 = vmatpush1.bf16.msra.mxu0 %v451
        %554 = vmatprep.subr.bf16.mxu0 %v457
        %555 = vmatpush1.bf16.msra.mxu0 %v456
        %556 = vmatprep.subr.bf16.mxu0 0
        %557 = vmatpush1.bf16.msra.mxu0 0
        %558 = vmatprep.subr.bf16.mxu0 0
        %559 = vmatpush1.bf16.msra.mxu0 0
        %560 = vmatprep.subr.bf16.mxu0 0
        %561 = vmatpush1.bf16.msra.mxu0 0
        %562 = vmatprep.subr.bf16.mxu0 0
        %563 = vmatpush1.bf16.msra.mxu0 0
        %564 = vmatprep.subr.bf16.mxu0 0
        %565 = vmatpush1.bf16.msra.mxu0 0
        %566 = vmatprep.subr.bf16.mxu0 0
        %567 = vmatpush1.bf16.msra.mxu0 0
        %568 = vmatprep.subr.bf16.mxu0 0
        %569 = vmatpush1.bf16.msra.mxu0 0
        %570 = vmatprep.subr.bf16.mxu0 0
        %571 = vmatpush1.bf16.msra.mxu0 0
        %572 = vmatprep.mubr.bf16.mxu0 0
        %573 = vmatmul.mubr.bf16.gmra.mrb[0].mxu0 %v215
        %v574 = vpop.f32.mrb[0].mxu0
        %v575 = vadd.f32 %v277, %v574
        %v576 = vpop.f32.mrb[0].mxu0
        %v577 = vadd.f32 %v281, %v576
        %v578 = vpop.f32.mrb[0].mxu0
        %v579 = vpop.f32.mrb[0].mxu0
        %580 = vdwg.mxu0
        %581 = vmatprep.subr.bf16.mxu0 0
        %582 = vmatpush1.bf16.msra.mxu0 %v423
        %583 = vmatprep.subr.bf16.mxu0 0
        %584 = vmatpush1.bf16.msra.mxu0 %v428
        %585 = vmatprep.subr.bf16.mxu0 0
        %586 = vmatpush1.bf16.msra.mxu0 %v433
        %587 = vmatprep.subr.bf16.mxu0 0
        %588 = vmatpush1.bf16.msra.mxu0 %v438
        %589 = vmatprep.subr.bf16.mxu0 0
        %590 = vmatpush1.bf16.msra.mxu0 %v443
        %591 = vmatprep.subr.bf16.mxu0 0
        %592 = vmatpush1.bf16.msra.mxu0 %v448
        %593 = vmatprep.subr.bf16.mxu0 0
        %594 = vmatpush1.bf16.msra.mxu0 %v453
        %595 = vmatprep.subr.bf16.mxu0 0
        %596 = vmatpush1.bf16.msra.mxu0 %v458
        %597 = vmatprep.subr.bf16.mxu0 0
        %598 = vmatpush1.bf16.msra.mxu0 0
        %599 = vmatprep.subr.bf16.mxu0 0
        %600 = vmatpush1.bf16.msra.mxu0 0
        %601 = vmatprep.subr.bf16.mxu0 0
        %602 = vmatpush1.bf16.msra.mxu0 0
        %603 = vmatprep.subr.bf16.mxu0 0
        %604 = vmatpush1.bf16.msra.mxu0 0
        %605 = vmatprep.subr.bf16.mxu0 0
        %606 = vmatpush1.bf16.msra.mxu0 0
        %607 = vmatprep.subr.bf16.mxu0 0
        %608 = vmatpush1.bf16.msra.mxu0 0
        %609 = vmatprep.subr.bf16.mxu0 0
        %610 = vmatpush1.bf16.msra.mxu0 0
        %611 = vmatprep.subr.bf16.mxu0 0
        %612 = vmatpush1.bf16.msra.mxu0 0
        %613 = vmatprep.mubr.bf16.mxu0 0
        %614 = vmatmul.mubr.bf16.gmra.mrb[0].mxu0 %v215
        %v615 = vpop.f32.mrb[0].mxu0
        %v616 = vadd.f32 %v285, %v615
        %v617 = vpop.f32.mrb[0].mxu0
        %v618 = vpop.f32.mrb[0].mxu0
        %v619 = vpop.f32.mrb[0].mxu0
        %620 = vdwg.mxu0
        %621 = vst [vmem:[%s212] sm:$0xff] %v534
        %622 = vst [vmem:[%s212 + $0x8] sm:$0xff] %v536
        %623 = vst [vmem:[%s212 + $0x10] sm:$0xff] %v575
        %624 = vst [vmem:[%s212 + $0x18] sm:$0xff] %v577
        %625 = vst [vmem:[%s212 + $0x20] sm:$0xff] %v616
        %s626 = sand.u32 %s97, 1
        %s627 = scalar_lea.sflag [#allocation4], %s626
        %s628 = sand.u32 %s97, 1
        %s629 = smul.addr %s628, 40
        %s630 = scalar_lea.vmem [#allocation8], %s629
        // Predicated region
        $region45: #{tpu_custom_call.1} parent=31 // pred_check
          %p631 = pneg %p107
        $region46: #{tpu_custom_call.1} parent=31 // pred_check_branch
          %633 = sbr.rel (%p631) target = $region48
        $region47: #{tpu_custom_call.1} parent=31 // pred_region
          %s635 = ssub.s32 640, 640
          %636 = vsyncadd %s627, %s635
          %s637 = smul.addr %s21, 5
          %s638 = smul.addr %s637, 128
          %s639 = scalar_lea.hbm %s3, %s638
          %s641 = sshll.u32 %s630, 4
          %s642 = int_to_ptr.vmem [resolvable:$true] %s641
          %644 = dma.vmem_to_hbm [thread:$0]  %s642, 640, %s639, %s627
        $region48: #{tpu_custom_call.1} parent=31 // pred_fallthru
          _
      $region32: #{tpu_custom_call.1} parent=5 // pred_fallthru
        _
      %p645 = scmp.le.s32.totalorder 2, %s16
      // Predicated region
      $region49: #{tpu_custom_call.1} parent=5 // pred_check
        %p646 = pneg %p645
      $region50: #{tpu_custom_call.1} parent=5 // pred_check_branch
        %648 = sbr.rel (%p646) target = $region52
      $region51: #{tpu_custom_call.1} parent=5 // pred_region
        %s649 = ssub.s32 %s16, 2
        // Predicated region
        $region53: #{tpu_custom_call.1} parent=51 // pred_check
          %p650 = pneg %p113
        $region54: #{tpu_custom_call.1} parent=51 // pred_check_branch
          %652 = sbr.rel (%p650) target = $region56
        $region55: #{tpu_custom_call.1} parent=51 // pred_region
          %s653 = sand.u32 %s98, 1
          %s654 = scalar_lea.sflag [#allocation4], %s653
          %s655 = sand.u32 %s98, 1
          %s656 = smul.addr %s655, 40
          %s657 = scalar_lea.vmem [#allocation8], %s656
          %658 = dma.done %s654, 640
        $region56: #{tpu_custom_call.1} parent=51 // pred_fallthru
          _
      $region52: #{tpu_custom_call.1} parent=5 // pred_fallthru
        _
    $region6: #{tpu_custom_call.1} parent=1 // loop_footer
      %s20 = sadd.s32 1, %s16
    $region7: #{tpu_custom_call.1} parent=1 // loop_footer_branch
      %15 = sbr.rel target = $region3
    $region8: #{tpu_custom_call.1} parent=1 // loop_exit
      _
    %659 = vsyncpa [#allocation3], 1
    %s660 = scalar_lea.sflag [#allocation3], 1
    %661 = vsyncpa %s660, 1
    %662 = vsyncpa [#allocation6], 1
    %663 = vsyncpa [#allocation4], 1
    %s664 = scalar_lea.sflag [#allocation4], 1
    %665 = vsyncpa %s664, 1

</llo_original>
